<compile_context>
chip_gen: v5e
topology: v5e:2x2
jax: 0.10.0
libtpu: 0.0.40
codegen_flags: <defaults>
</compile_context>

<pallas_src>
import jax
import jax.numpy as jnp
from jax.experimental import pallas as pl
from jax.experimental.pallas import tpu as pltpu

LN_BEFORE_EPS = 1e-5    # torch.nn.LayerNorm default
BERT_LN_EPS = 1e-12     # BertConfig default layer_norm_eps


def _nfe_kernel(
    x_ref,       # [bB, F]   raw numeric features (batch block)
    w_ref,       # [F, H]    folded weights:  g1[f] * W[f, :]
    bias_ref,    # [F, H]    folded bias:     b1[f]*W[f,:] + lin_b[f,:] + pos[f,:] + tok[:]
    g2_ref,      # [1, H]    embeddings.LayerNorm gamma
    b2_ref,      # [1, H]    embeddings.LayerNorm beta
    out_ref,     # [bB, F, H]
):
    x = x_ref[...]                                             # [bB, F]

    # ---- ln_before: LayerNorm over the feature dim (affine folded into w/bias) ----
    mean = jnp.mean(x, axis=-1, keepdims=True)
    cent = x - mean
    var = jnp.mean(cent * cent, axis=-1, keepdims=True)
    xh = cent * jax.lax.rsqrt(var + LN_BEFORE_EPS)             # [bB, F]

    # ---- per-feature Linear(1,H) + all additive embedding terms (single FMA) ----
    y = xh[:, :, None] * w_ref[...][None, :, :] + bias_ref[...][None, :, :]   # [bB,F,H]

    # ---- BERT embeddings LayerNorm over H (centered two-pass; reuse the centered term) ----
    m2 = jnp.mean(y, axis=-1, keepdims=True)                   # [bB, F, 1]
    c2 = y - m2                                                # [bB, F, H]
    v2 = jnp.mean(c2 * c2, axis=-1, keepdims=True)             # [bB, F, 1]
    inv = jax.lax.rsqrt(v2 + BERT_LN_EPS)                      # [bB, F, 1]
    out_ref[...] = (c2 * inv * g2_ref[0, :][None, None, :]
                    + b2_ref[0, :][None, None, :]).astype(out_ref.dtype)


def _choose_block_b(B, F, H, itemsize, target_out_bytes=8 * 1024 * 1024):
    """Pick the batch block so the double-buffered output block stays within budget
    (budget sized for v7x's 64 MiB VMEM; larger gens just pipeline more grid steps)."""
    per_row = 2 * F * H * itemsize            # double-buffered output bytes per batch row
    bb = max(1, target_out_bytes // per_row)
    if bb >= B:
        return B
    return max(8, (bb // 8) * 8)              # keep the x block's sublane dim a multiple of 8


def num_feature_extractor(x, params, *, block_b=None, out_dtype=jnp.float32):
    """x: [B, F] float32 -> [B, F, H] out_dtype (f32 default; pass bf16 if downstream is bf16)."""
    B, F = x.shape
    H = params["w"].shape[1]
    # Lane-dense stores require H % 128 == 0 (true for BERT hidden sizes); other H still
    # lower correctly (full-extent block) but with masked partial stores.

    # Fold ln_before affine + lin_b + pos + tok into one weight table and one bias table.
    g1 = params["g1"][0]                                    # [F]
    b1 = params["b1"][0]                                    # [F]
    w_eff = params["w"] * g1[:, None]                       # [F, H]
    bias_eff = (params["w"] * b1[:, None] + params["lin_b"]
                + params["pos"] + params["tok"][0][None, :])   # [F, H]

    itemsize = jnp.dtype(out_dtype).itemsize
    bB = block_b if block_b is not None else _choose_block_b(B, F, H, itemsize)
    grid = (pl.cdiv(B, bB),)

    # Conservative VMEM estimate: double-buffered output block + block-sized f32 temps
    # (y, c2, epilogue) + double-buffered param tables + x block + slack; clamped so it
    # stays legal on v7x (64 MiB physical).
    vmem_bytes = (2 * bB * F * H * itemsize      # output double buffer
                  + 4 * bB * F * H * 4           # in-kernel f32 temporaries
                  + 2 * 2 * F * H * 4            # w_eff / bias_eff (double-buffer worst case)
                  + 2 * bB * F * 4               # x block
                  + (1 << 20))                   # slack
    vmem_limit = int(min(max(vmem_bytes, 32 * 1024 * 1024), 48 * 1024 * 1024))

    return pl.pallas_call(
        _nfe_kernel,
        out_shape=jax.ShapeDtypeStruct((B, F, H), out_dtype),
        grid_spec=pltpu.PrefetchScalarGridSpec(
            num_scalar_prefetch=0,
            grid=grid,
            in_specs=[
                pl.BlockSpec((bB, F), lambda i: (i, 0)),    # x batch block
                pl.BlockSpec((F, H), lambda i: (0, 0)),     # folded weights (block index constant -> resident)
                pl.BlockSpec((F, H), lambda i: (0, 0)),     # folded bias (resident)
                pl.BlockSpec((1, H), lambda i: (0, 0)),     # g2
                pl.BlockSpec((1, H), lambda i: (0, 0)),     # b2
            ],
            out_specs=pl.BlockSpec((bB, F, H), lambda i: (i, 0, 0)),
        ),
        compiler_params=pltpu.CompilerParams(
            dimension_semantics=("parallel",),              # shards batch blocks across TCs on v7x
            vmem_limit_bytes=vmem_limit,
        ),
    )(x, w_eff, bias_eff, params["g2"], params["b2"])


def make_params(key, num_feat_dim, hidden_dim, max_position_embeddings=512):
    """Deterministic synthetic parameters matching the module's __init__ shapes."""
    ks = jax.random.split(key, 6)
    F, H = num_feat_dim, hidden_dim
    # IndependentFeatureLinearLayers: F copies of Linear(1, H) -> stacked to [F, H].
    w = jax.random.normal(ks[0], (F, H), jnp.float32) * 0.02
    lin_b = jax.random.normal(ks[1], (F, H), jnp.float32) * 0.02
    # BertEmbeddings tables; position gather 0..F-1 and token_type id 0 resolved outside the kernel.
    pos_table = jax.random.normal(ks[2], (max_position_embeddings, H), jnp.float32) * 0.02
    tok_table = jax.random.normal(ks[3], (2, H), jnp.float32) * 0.02
    pos = pos_table[:F, :]                       # [F, H]
    tok = tok_table[0:1, :]                      # [1, H]
    g1 = 1.0 + 0.01 * jax.random.normal(ks[4], (1, F), jnp.float32)
    b1 = jnp.zeros((1, F), jnp.float32)
    g2 = 1.0 + 0.01 * jax.random.normal(ks[5], (1, H), jnp.float32)
    b2 = jnp.zeros((1, H), jnp.float32)
    return dict(w=w, lin_b=lin_b, pos=pos, tok=tok, g1=g1, b1=b1, g2=g2, b2=b2)


def reference(x, p):
    """Pure-JAX reference of the same forward pass (for sanity checking)."""
    mean = jnp.mean(x, axis=-1, keepdims=True)
    var = jnp.mean((x - mean) ** 2, axis=-1, keepdims=True)
    xn = (x - mean) / jnp.sqrt(var + LN_BEFORE_EPS) * p["g1"][0] + p["b1"][0]
    y = xn[:, :, None] * p["w"][None] + p["lin_b"][None]
    y = y + p["pos"][None] + p["tok"][0][None, None]
    m2 = jnp.mean(y, axis=-1, keepdims=True)
    v2 = jnp.mean((y - m2) ** 2, axis=-1, keepdims=True)
    return (y - m2) / jnp.sqrt(v2 + BERT_LN_EPS) * p["g2"][0] + p["b2"][0]


if __name__ == "__main__":
    B, F, H = 16, 8, 128   # batch, num_feat_dim, language_model_hidden_dim
    key = jax.random.PRNGKey(0)
    kx, kp = jax.random.split(key)
    x = jax.random.normal(kx, (B, F), jnp.float32)
    params = make_params(kp, F, H)

    # block_b=8 -> grid of 2 batch blocks, exercising the pipelined path at small shapes.
    out = num_feature_extractor(x, params, block_b=8)
    out = jax.block_until_ready(out)

    ref = reference(x, params)
    assert out.shape == (B, F, H)
    assert jnp.allclose(out, ref, atol=1e-4, rtol=1e-4), "mismatch vs reference"
    print("KERNEL_OK")
</pallas_src>

<mosaic_0001>
module attributes {stable_mosaic.version = 11 : i64} {
  func.func @_nfe_kernel(%arg0: i32, %arg1: memref<8x8xf32, #tpu.memory_space<vmem>>, %arg2: memref<8x128xf32, #tpu.memory_space<vmem>>, %arg3: memref<8x128xf32, #tpu.memory_space<vmem>>, %arg4: memref<1x128xf32, #tpu.memory_space<vmem>>, %arg5: memref<1x128xf32, #tpu.memory_space<vmem>>, %arg6: memref<8x8x128xf32, #tpu.memory_space<vmem>>) attributes {dimension_semantics = [#tpu.dimension_semantics<parallel>], iteration_bounds = array<i64: 2>, scalar_prefetch = 0 : i64, scratch_operands = 0 : i64, tpu.core_type = #tpu.core_type<tc>, window_params = [{transform_indices = @transform_0, window_bounds = array<i64: 8, 8>}, {pipeline_mode = #tpu.pipeline_mode<synchronous>, transform_indices = @transform_1, window_bounds = array<i64: 8, 128>}, {pipeline_mode = #tpu.pipeline_mode<synchronous>, transform_indices = @transform_2, window_bounds = array<i64: 8, 128>}, {pipeline_mode = #tpu.pipeline_mode<synchronous>, transform_indices = @transform_3, window_bounds = array<i64: 1, 128>}, {pipeline_mode = #tpu.pipeline_mode<synchronous>, transform_indices = @transform_4, window_bounds = array<i64: 1, 128>}, {transform_indices = @transform_5, window_bounds = array<i64: 8, 8, 128>}]} {
    %c0 = arith.constant 0 : index
    %c0_0 = arith.constant 0 : index
    %0 = vector.load %arg1[%c0, %c0_0] : memref<8x8xf32, #tpu.memory_space<vmem>>, vector<8x8xf32>
    %cst = arith.constant dense<0.000000e+00> : vector<8xf32>
    %1 = vector.multi_reduction <add>, %0, %cst [1] : vector<8x8xf32> to vector<8xf32>
    %2 = vector.shape_cast %1 : vector<8xf32> to vector<8x1xf32>
    %cst_1 = arith.constant 8.000000e+00 : f32
    %3 = vector.broadcast %cst_1 : f32 to vector<8x1xf32>
    %4 = arith.divf %2, %3 : vector<8x1xf32>
    %5 = vector.broadcast %4 : vector<8x1xf32> to vector<8x8xf32>
    %6 = arith.subf %0, %5 : vector<8x8xf32>
    %7 = arith.mulf %6, %6 : vector<8x8xf32>
    %cst_2 = arith.constant dense<0.000000e+00> : vector<8xf32>
    %8 = vector.multi_reduction <add>, %7, %cst_2 [1] : vector<8x8xf32> to vector<8xf32>
    %9 = vector.shape_cast %8 : vector<8xf32> to vector<8x1xf32>
    %cst_3 = arith.constant 8.000000e+00 : f32
    %10 = vector.broadcast %cst_3 : f32 to vector<8x1xf32>
    %11 = arith.divf %9, %10 : vector<8x1xf32>
    %cst_4 = arith.constant 9.99999974E-6 : f32
    %12 = vector.broadcast %cst_4 : f32 to vector<8x1xf32>
    %13 = arith.addf %11, %12 : vector<8x1xf32>
    %14 = math.rsqrt %13 : vector<8x1xf32>
    %15 = vector.broadcast %14 : vector<8x1xf32> to vector<8x8xf32>
    %16 = arith.mulf %6, %15 : vector<8x8xf32>
    %17 = vector.shape_cast %16 : vector<8x8xf32> to vector<8x8x1xf32>
    %c0_5 = arith.constant 0 : index
    %c0_6 = arith.constant 0 : index
    %18 = vector.load %arg2[%c0_5, %c0_6] : memref<8x128xf32, #tpu.memory_space<vmem>>, vector<8x128xf32>
    %19 = vector.shape_cast %18 : vector<8x128xf32> to vector<1x8x128xf32>
    %20 = vector.broadcast %17 : vector<8x8x1xf32> to vector<8x8x128xf32>
    %21 = vector.broadcast %19 : vector<1x8x128xf32> to vector<8x8x128xf32>
    %22 = arith.mulf %20, %21 : vector<8x8x128xf32>
    %c0_7 = arith.constant 0 : index
    %c0_8 = arith.constant 0 : index
    %23 = vector.load %arg3[%c0_7, %c0_8] : memref<8x128xf32, #tpu.memory_space<vmem>>, vector<8x128xf32>
    %24 = vector.shape_cast %23 : vector<8x128xf32> to vector<1x8x128xf32>
    %25 = vector.broadcast %24 : vector<1x8x128xf32> to vector<8x8x128xf32>
    %26 = arith.addf %22, %25 : vector<8x8x128xf32>
    %cst_9 = arith.constant dense<0.000000e+00> : vector<8x8xf32>
    %27 = vector.multi_reduction <add>, %26, %cst_9 [2] : vector<8x8x128xf32> to vector<8x8xf32>
    %28 = vector.shape_cast %27 : vector<8x8xf32> to vector<8x8x1xf32>
    %cst_10 = arith.constant 1.280000e+02 : f32
    %29 = vector.broadcast %cst_10 : f32 to vector<8x8x1xf32>
    %30 = arith.divf %28, %29 : vector<8x8x1xf32>
    %31 = vector.broadcast %30 : vector<8x8x1xf32> to vector<8x8x128xf32>
    %32 = arith.subf %26, %31 : vector<8x8x128xf32>
    %33 = arith.mulf %32, %32 : vector<8x8x128xf32>
    %cst_11 = arith.constant dense<0.000000e+00> : vector<8x8xf32>
    %34 = vector.multi_reduction <add>, %33, %cst_11 [2] : vector<8x8x128xf32> to vector<8x8xf32>
    %35 = vector.shape_cast %34 : vector<8x8xf32> to vector<8x8x1xf32>
    %cst_12 = arith.constant 1.280000e+02 : f32
    %36 = vector.broadcast %cst_12 : f32 to vector<8x8x1xf32>
    %37 = arith.divf %35, %36 : vector<8x8x1xf32>
    %cst_13 = arith.constant 9.99999996E-13 : f32
    %38 = vector.broadcast %cst_13 : f32 to vector<8x8x1xf32>
    %39 = arith.addf %37, %38 : vector<8x8x1xf32>
    %40 = math.rsqrt %39 : vector<8x8x1xf32>
    %41 = vector.broadcast %40 : vector<8x8x1xf32> to vector<8x8x128xf32>
    %42 = arith.mulf %32, %41 : vector<8x8x128xf32>
    %c0_14 = arith.constant 0 : index
    %c0_15 = arith.constant 0 : index
    %43 = vector.load %arg4[%c0_14, %c0_15] : memref<1x128xf32, #tpu.memory_space<vmem>>, vector<1x128xf32>
    %44 = vector.shape_cast %43 : vector<1x128xf32> to vector<128xf32>
    %45 = vector.shape_cast %44 : vector<128xf32> to vector<1x1x128xf32>
    %46 = vector.broadcast %45 : vector<1x1x128xf32> to vector<8x8x128xf32>
    %47 = arith.mulf %42, %46 : vector<8x8x128xf32>
    %c0_16 = arith.constant 0 : index
    %c0_17 = arith.constant 0 : index
    %48 = vector.load %arg5[%c0_16, %c0_17] : memref<1x128xf32, #tpu.memory_space<vmem>>, vector<1x128xf32>
    %49 = vector.shape_cast %48 : vector<1x128xf32> to vector<128xf32>
    %50 = vector.shape_cast %49 : vector<128xf32> to vector<1x1x128xf32>
    %51 = vector.broadcast %50 : vector<1x1x128xf32> to vector<8x8x128xf32>
    %52 = arith.addf %47, %51 : vector<8x8x128xf32>
    %c0_18 = arith.constant 0 : index
    %c0_19 = arith.constant 0 : index
    %c0_20 = arith.constant 0 : index
    %53 = vector.load %arg6[%c0_18, %c0_19, %c0_20] : memref<8x8x128xf32, #tpu.memory_space<vmem>>, vector<8x8x128xf32>
    tpu.vector_store %arg6[%c0_18, %c0_19, %c0_20], %52 {strides = array<i32>} : memref<8x8x128xf32, #tpu.memory_space<vmem>>, vector<8x8x128xf32>,
    return
  }
  func.func @transform_0(%arg0: i32) -> (i32, i32) {
    %c0_i32 = arith.constant 0 : i32
    %c0_i32_0 = arith.constant 0 : i32
    return %arg0, %c0_i32 : i32, i32
  }
  func.func @transform_1(%arg0: i32) -> (i32, i32) {
    %c0_i32 = arith.constant 0 : i32
    %c0_i32_0 = arith.constant 0 : i32
    %c0_i32_1 = arith.constant 0 : i32
    return %c0_i32, %c0_i32_0 : i32, i32
  }
  func.func @transform_2(%arg0: i32) -> (i32, i32) {
    %c0_i32 = arith.constant 0 : i32
    %c0_i32_0 = arith.constant 0 : i32
    %c0_i32_1 = arith.constant 0 : i32
    return %c0_i32, %c0_i32_0 : i32, i32
  }
  func.func @transform_3(%arg0: i32) -> (i32, i32) {
    %c0_i32 = arith.constant 0 : i32
    %c0_i32_0 = arith.constant 0 : i32
    %c0_i32_1 = arith.constant 0 : i32
    return %c0_i32, %c0_i32_0 : i32, i32
  }
  func.func @transform_4(%arg0: i32) -> (i32, i32) {
    %c0_i32 = arith.constant 0 : i32
    %c0_i32_0 = arith.constant 0 : i32
    %c0_i32_1 = arith.constant 0 : i32
    return %c0_i32, %c0_i32_0 : i32, i32
  }
  func.func @transform_5(%arg0: i32) -> (i32, i32, i32) {
    %c0_i32 = arith.constant 0 : i32
    %c0_i32_0 = arith.constant 0 : i32
    %c0_i32_1 = arith.constant 0 : i32
    return %arg0, %c0_i32, %c0_i32_0 : i32, i32, i32
  }
}

</mosaic_0001>

<llo_original>
// kernel: tpu_custom_call.1
$region0: #{tpu_custom_call.1}
  #allocation0 [shape = 'u32[]', space=smem, size = 0x4, offset = 0x4, fixed_abs, tag = 'smem constant byte address 0x4 - core index']
  #allocation1 [shape = 'u32[72,128]{1,0:T(1,128)}', space=vmem, size = 0x9000, scoped, tag = 'internal scratch']
  %s0 = inlined_call_operand.vmem [shape: f32[16,8], index: 0, kind: input, shape index: {}]
  %s1 = inlined_call_operand.vmem [shape: f32[8,128], index: 1, kind: input, shape index: {}]
  %s2 = inlined_call_operand.vmem [shape: f32[8,128], index: 2, kind: input, shape index: {}]
  %s3 = inlined_call_operand.vmem [shape: f32[1,128], index: 3, kind: input, shape index: {}]
  %s4 = inlined_call_operand.vmem [shape: f32[1,128], index: 4, kind: input, shape index: {}]
  %s5 = inlined_call_operand.hbm [shape: f32[16,8,128], index: 5, kind: output, shape index: {}]
  %s6 = sld [smem:[#allocation0]]
  $region53: #{tpu_custom_call.1} parent=0
    _
  %s8 = ssub.s32 1, %s6
  %s9 = scalar_select 0, %s8, %s6
  $region1: #{tpu_custom_call.1} parent=0
    #allocation2 [shape = 'u8[65536]{0}', space=vmem, size = 0x10000, scoped, tag = 'output window, operand 0']
    #allocation3 [shape = 's32[2]{0}', space=sflag, size = 0x8, scoped, tag = 'scoped memory for tpu_custom_call.1']
    %10 = vsyncpa [#allocation3], 0
    %s11 = scalar_lea.sflag [#allocation3], 1
    %12 = vsyncpa %s11, 0
    loop: start=0, step=1, limit=4
    $region2: #{tpu_custom_call.1} parent=1 // loop_pre_header
      _
    $region3: #{tpu_custom_call.1} parent=1 // loop_header
      %s14 = sphi 0, %s18
      %p15 = scmp.ge.s32.totalorder %s14, 4
      %s24 = sphi 0, %s26
      %s27 = sphi 0, %s24
      %s28 = sphi 0, %s27
      %s44 = sphi 0, %s28
      %s48 = sphi 0, %s48
      %s50 = sphi 0, %s48
      %s51 = sphi 0, %s50
      %s65 = sphi 0, %s51
      %s69 = sphi 0, %s69
      %s71 = sphi 0, %s69
      %s72 = sphi 0, %s71
      %s86 = sphi 0, %s72
      %s90 = sphi 0, %s90
      %s92 = sphi 0, %s90
      %s93 = sphi 0, %s92
      %s107 = sphi 0, %s93
      %s111 = sphi 0, %s111
      %s113 = sphi 0, %s111
      %s114 = sphi 0, %s113
      %s128 = sphi 0, %s114
      %s134 = sphi 0, %s136
      %s137 = sphi 0, %s134
      %s138 = sphi 0, %s137
      %s154 = sphi 0, %s138
    $region4: #{tpu_custom_call.1} parent=1 // loop_header_branch
      %17 = sbr.rel (%p15) target = $region8
    $region5: #{tpu_custom_call.1} parent=1 // loop_body
      %s19 = ssub.s32 %s14, 1
      %s20 = ssub.s32 %s14, 2
      %s21 = sadd.s32 %s14, 1
      %s22 = ssub.s32 %s14, %s21
      %p23 = scmp.eq.s32.totalorder %s22, 0
      %s25 = sadd.s32 %s24, 1
      %s26 = scalar_select %p23, %s24, %s25
      %p29 = pneg %p23
      %p30 = scmp.eq.s32.totalorder %s14, 1
      %p31 = por %p29, %p30
      %p32 = scmp.ne.s32.totalorder %s24, %s27
      %p33 = scmp.eq.s32.totalorder %s14, 0
      %p34 = por %p32, %p33
      %p35 = scmp.ne.s32.totalorder %s24, %s27
      %p36 = scmp.eq.s32.totalorder %s19, 1
      %p37 = por %p35, %p36
      %p38 = scmp.ne.s32.totalorder %s27, %s28
      %p39 = scmp.eq.s32.totalorder %s19, 0
      %p40 = por %p38, %p39
      %p41 = scmp.ne.s32.totalorder %s27, %s28
      %p42 = scmp.eq.s32.totalorder %s20, 1
      %p43 = por %p41, %p42
      %p45 = scmp.ne.s32.totalorder %s28, %s44
      %p46 = scmp.eq.s32.totalorder %s20, 0
      %p47 = por %p45, %p46
      %s49 = sadd.s32 %s48, 1
      %p52 = scmp.eq.s32.totalorder %s14, 1
      %p53 = scmp.ne.s32.totalorder %s48, %s50
      %p54 = scmp.eq.s32.totalorder %s14, 0
      %p55 = por %p53, %p54
      %p56 = scmp.ne.s32.totalorder %s48, %s50
      %p57 = scmp.eq.s32.totalorder %s19, 1
      %p58 = por %p56, %p57
      %p59 = scmp.ne.s32.totalorder %s50, %s51
      %p60 = scmp.eq.s32.totalorder %s19, 0
      %p61 = por %p59, %p60
      %p62 = scmp.ne.s32.totalorder %s50, %s51
      %p63 = scmp.eq.s32.totalorder %s20, 1
      %p64 = por %p62, %p63
      %p66 = scmp.ne.s32.totalorder %s51, %s65
      %p67 = scmp.eq.s32.totalorder %s20, 0
      %p68 = por %p66, %p67
      %s70 = sadd.s32 %s69, 1
      %p73 = scmp.eq.s32.totalorder %s14, 1
      %p74 = scmp.ne.s32.totalorder %s69, %s71
      %p75 = scmp.eq.s32.totalorder %s14, 0
      %p76 = por %p74, %p75
      %p77 = scmp.ne.s32.totalorder %s69, %s71
      %p78 = scmp.eq.s32.totalorder %s19, 1
      %p79 = por %p77, %p78
      %p80 = scmp.ne.s32.totalorder %s71, %s72
      %p81 = scmp.eq.s32.totalorder %s19, 0
      %p82 = por %p80, %p81
      %p83 = scmp.ne.s32.totalorder %s71, %s72
      %p84 = scmp.eq.s32.totalorder %s20, 1
      %p85 = por %p83, %p84
      %p87 = scmp.ne.s32.totalorder %s72, %s86
      %p88 = scmp.eq.s32.totalorder %s20, 0
      %p89 = por %p87, %p88
      %s91 = sadd.s32 %s90, 1
      %p94 = scmp.eq.s32.totalorder %s14, 1
      %p95 = scmp.ne.s32.totalorder %s90, %s92
      %p96 = scmp.eq.s32.totalorder %s14, 0
      %p97 = por %p95, %p96
      %p98 = scmp.ne.s32.totalorder %s90, %s92
      %p99 = scmp.eq.s32.totalorder %s19, 1
      %p100 = por %p98, %p99
      %p101 = scmp.ne.s32.totalorder %s92, %s93
      %p102 = scmp.eq.s32.totalorder %s19, 0
      %p103 = por %p101, %p102
      %p104 = scmp.ne.s32.totalorder %s92, %s93
      %p105 = scmp.eq.s32.totalorder %s20, 1
      %p106 = por %p104, %p105
      %p108 = scmp.ne.s32.totalorder %s93, %s107
      %p109 = scmp.eq.s32.totalorder %s20, 0
      %p110 = por %p108, %p109
      %s112 = sadd.s32 %s111, 1
      %p115 = scmp.eq.s32.totalorder %s14, 1
      %p116 = scmp.ne.s32.totalorder %s111, %s113
      %p117 = scmp.eq.s32.totalorder %s14, 0
      %p118 = por %p116, %p117
      %p119 = scmp.ne.s32.totalorder %s111, %s113
      %p120 = scmp.eq.s32.totalorder %s19, 1
      %p121 = por %p119, %p120
      %p122 = scmp.ne.s32.totalorder %s113, %s114
      %p123 = scmp.eq.s32.totalorder %s19, 0
      %p124 = por %p122, %p123
      %p125 = scmp.ne.s32.totalorder %s113, %s114
      %p126 = scmp.eq.s32.totalorder %s20, 1
      %p127 = por %p125, %p126
      %p129 = scmp.ne.s32.totalorder %s114, %s128
      %p130 = scmp.eq.s32.totalorder %s20, 0
      %p131 = por %p129, %p130
      %s132 = ssub.s32 %s14, %s21
      %p133 = scmp.eq.s32.totalorder %s132, 0
      %s135 = sadd.s32 %s134, 1
      %s136 = scalar_select %p133, %s134, %s135
      %p139 = pneg %p133
      %p140 = scmp.eq.s32.totalorder %s14, 1
      %p141 = por %p139, %p140
      %p142 = scmp.ne.s32.totalorder %s134, %s137
      %p143 = scmp.eq.s32.totalorder %s14, 0
      %p144 = por %p142, %p143
      %p145 = scmp.ne.s32.totalorder %s134, %s137
      %p146 = scmp.eq.s32.totalorder %s19, 1
      %p147 = por %p145, %p146
      %p148 = scmp.ne.s32.totalorder %s137, %s138
      %p149 = scmp.eq.s32.totalorder %s19, 0
      %p150 = por %p148, %p149
      %p151 = scmp.ne.s32.totalorder %s137, %s138
      %p152 = scmp.eq.s32.totalorder %s20, 1
      %p153 = por %p151, %p152
      %p155 = scmp.ne.s32.totalorder %s138, %s154
      %p156 = scmp.eq.s32.totalorder %s20, 0
      %p157 = por %p155, %p156
      %p158 = scmp.le.s32.totalorder 1, %s14
      %p159 = scmp.lt.s32.totalorder %s14, 3
      %p160 = pnand %p158, %p159
      %p161 = pneg %p160
      // Predicated region
      $region9: #{tpu_custom_call.1} parent=5 // pred_check
        _
      $region10: #{tpu_custom_call.1} parent=5 // pred_check_branch
        %163 = sbr.rel (%p160) target = $region12
      $region11: #{tpu_custom_call.1} parent=5 // pred_region
        %s164 = ssub.s32 %s14, 1
        // Predicated region
        $region13: #{tpu_custom_call.1} parent=11 // pred_check
          %p165 = pneg %p61
        $region14: #{tpu_custom_call.1} parent=11 // pred_check_branch
          %167 = sbr.rel (%p165) target = $region16
        $region15: #{tpu_custom_call.1} parent=11 // pred_region
          _
        $region16: #{tpu_custom_call.1} parent=11 // pred_fallthru
          _
        // Predicated region
        $region17: #{tpu_custom_call.1} parent=11 // pred_check
          %p168 = pneg %p82
        $region18: #{tpu_custom_call.1} parent=11 // pred_check_branch
          %170 = sbr.rel (%p168) target = $region20
        $region19: #{tpu_custom_call.1} parent=11 // pred_region
          _
        $region20: #{tpu_custom_call.1} parent=11 // pred_fallthru
          _
        // Predicated region
        $region21: #{tpu_custom_call.1} parent=11 // pred_check
          %p171 = pneg %p103
        $region22: #{tpu_custom_call.1} parent=11 // pred_check_branch
          %173 = sbr.rel (%p171) target = $region24
        $region23: #{tpu_custom_call.1} parent=11 // pred_region
          _
        $region24: #{tpu_custom_call.1} parent=11 // pred_fallthru
          _
        // Predicated region
        $region25: #{tpu_custom_call.1} parent=11 // pred_check
          %p174 = pneg %p124
        $region26: #{tpu_custom_call.1} parent=11 // pred_check_branch
          %176 = sbr.rel (%p174) target = $region28
        $region27: #{tpu_custom_call.1} parent=11 // pred_region
          _
        $region28: #{tpu_custom_call.1} parent=11 // pred_fallthru
          _
      $region12: #{tpu_custom_call.1} parent=5 // pred_fallthru
        _
      %p177 = scmp.lt.s32.totalorder %s14, 2
      // Predicated region
      $region29: #{tpu_custom_call.1} parent=5 // pred_check
        %p178 = pneg %p177
      $region30: #{tpu_custom_call.1} parent=5 // pred_check_branch
        %180 = sbr.rel (%p178) target = $region32
      $region31: #{tpu_custom_call.1} parent=5 // pred_region
        // Predicated region
        $region33: #{tpu_custom_call.1} parent=31 // pred_check
          %p181 = pneg %p34
        $region34: #{tpu_custom_call.1} parent=31 // pred_check_branch
          %183 = sbr.rel (%p181) target = $region36
        $region35: #{tpu_custom_call.1} parent=31 // pred_region
          %p184 = scmp.lt.s32.totalorder %s14, 1
          %s185 = scalar_select %p184, %s14, 1
          %s186 = smul.addr %s185, 8
          %s187 = scalar_lea.vmem %s0, %s186
        $region36: #{tpu_custom_call.1} parent=31 // pred_fallthru
          _
      $region32: #{tpu_custom_call.1} parent=5 // pred_fallthru
        _
      %p188 = scmp.le.s32.totalorder 1, %s14
      %p189 = scmp.lt.s32.totalorder %s14, 3
      %p190 = pnand %p188, %p189
      %p191 = pneg %p190
      // Predicated region
      $region37: #{tpu_custom_call.1} parent=5 // pred_check
        _
      $region38: #{tpu_custom_call.1} parent=5 // pred_check_branch
        %193 = sbr.rel (%p190) target = $region40
      $region39: #{tpu_custom_call.1} parent=5 // pred_region
        %s194 = ssub.s32 %s14, 1
        %p195 = scmp.lt.s32.totalorder %s19, 1
        %s196 = scalar_select %p195, %s19, 1
        %s197 = smul.addr %s196, 8
        %s198 = scalar_lea.vmem %s0, %s197
        %p199 = pneg %p40
        %p200 = pneg %p37
        %p201 = pneg %p61
        %p202 = pneg %p58
        %p203 = pneg %p82
        %p204 = pneg %p79
        %p205 = pneg %p103
        %p206 = pneg %p100
        %p207 = pneg %p124
        %p208 = pneg %p121
        %p209 = pneg %p150
        %p210 = pneg %p147
        %s211 = sand.u32 %s137, 1
        %s212 = scalar_lea.sflag [#allocation3], %s211
        %s213 = sand.u32 %s137, 1
        %s214 = smul.addr %s213, 64
        %s215 = scalar_lea.vmem [#allocation2], %s214
        %p216 = scmp.lt.s32.totalorder %s19, 1
        %s217 = scalar_select %p216, %s19, 1
        %s218 = smul.addr %s217, 8
        %s219 = scalar_lea.vmem %s0, %s218
        %s220 = smul.u32 8, %s19
        %v221 = vld [vmem:[%s219] sm:$0xff]
        %vm222 = vcmask 64512
        %v223 = vsel %vm222, %v221, 0.0
        %224 = vadd.xlane.f32.xlu0 %v223
        %v225 = vpop.xlane.xlu0 %224
        %v226 = vrcp.pop 8.0
        %v227 = vmul.f32 8.0, %v226
        %v228 = vsub.f32 1.0, %v227
        %v229 = vmul.f32 %v226, %v228
        %v230 = vadd.f32 %v226, %v229
        %vm231 = vweird.f32 %v226
        %v232 = vsel %vm231, %v226, %v230
        %v233 = vmul.f32 %v225, %v232
        %v234 = vsub.f32 %v221, %v233
        %v235 = vmul.f32 %v234, %v234
        %v236 = vsel %vm222, %v235, 0.0
        %237 = vadd.xlane.f32.xlu0 %v236
        %v238 = vpop.xlane.xlu0 %237
        %v239 = vmul.f32 %v238, %v232
        %v240 = vadd.f32 %v239, 1e-05
        %v241 = vrsqrt.pop %v240
        %v242 = vmul.f32 %v241, %v240
        %v243 = vmul.f32 %v242, %v241
        %v244 = vmul.f32 0.5, %v243
        %v245 = vsub.f32 1.5, %v244
        %v246 = vmul.f32 %v241, %v245
        %vm247 = vweird.f32 %v240
        %vm248 = vweird.f32 %v241
        %vm249 = vmor %vm247, %vm248
        %v250 = vsel %vm249, %v241, %v246
        %v251 = vmul.f32 %v234, %v250
        %v252 = vperm.slane %v251, 0
        %v253 = vlaneseq
        %v254 = vshrl.u32 %v253, 7
        %256 = vset.pattern.permute.xlu0 %v254
        %257 = vperm.xlu0 %256, %v252
        %v258 = vpop.permute.xlu0 %257
        %v259 = vperm.slane %v251, 1
        %v260 = vlaneseq
        %v261 = vshrl.u32 %v260, 7
        %263 = vset.pattern.permute.xlu0 %v261
        %264 = vperm.xlu0 %263, %v259
        %v265 = vpop.permute.xlu0 %264
        %v266 = vperm.slane %v251, 2
        %v267 = vlaneseq
        %v268 = vshrl.u32 %v267, 7
        %270 = vset.pattern.permute.xlu0 %v268
        %271 = vperm.xlu0 %270, %v266
        %v272 = vpop.permute.xlu0 %271
        %v273 = vperm.slane %v251, 3
        %v274 = vlaneseq
        %v275 = vshrl.u32 %v274, 7
        %277 = vset.pattern.permute.xlu0 %v275
        %278 = vperm.xlu0 %277, %v273
        %v279 = vpop.permute.xlu0 %278
        %v280 = vperm.slane %v251, 4
        %v281 = vlaneseq
        %v282 = vshrl.u32 %v281, 7
        %284 = vset.pattern.permute.xlu0 %v282
        %285 = vperm.xlu0 %284, %v280
        %v286 = vpop.permute.xlu0 %285
        %v287 = vperm.slane %v251, 5
        %v288 = vlaneseq
        %v289 = vshrl.u32 %v288, 7
        %291 = vset.pattern.permute.xlu0 %v289
        %292 = vperm.xlu0 %291, %v287
        %v293 = vpop.permute.xlu0 %292
        %v294 = vperm.slane %v251, 6
        %v295 = vlaneseq
        %v296 = vshrl.u32 %v295, 7
        %298 = vset.pattern.permute.xlu0 %v296
        %299 = vperm.xlu0 %298, %v294
        %v300 = vpop.permute.xlu0 %299
        %v301 = vperm.slane %v251, 7
        %v302 = vlaneseq
        %v303 = vshrl.u32 %v302, 7
        %305 = vset.pattern.permute.xlu0 %v303
        %306 = vperm.xlu0 %305, %v301
        %v307 = vpop.permute.xlu0 %306
        %v308 = vld [vmem:[%s1] sm:$0xff]
        %v309 = vmul.f32 %v258, %v308
        %v310 = vmul.f32 %v265, %v308
        %v311 = vmul.f32 %v272, %v308
        %v312 = vmul.f32 %v279, %v308
        %v313 = vmul.f32 %v286, %v308
        %v314 = vmul.f32 %v293, %v308
        %v315 = vmul.f32 %v300, %v308
        %v316 = vmul.f32 %v307, %v308
        %v317 = vld [vmem:[%s2] sm:$0xff]
        %v318 = vadd.f32 %v309, %v317
        %v319 = vadd.f32 %v310, %v317
        %v320 = vadd.f32 %v311, %v317
        %v321 = vadd.f32 %v312, %v317
        %v322 = vadd.f32 %v313, %v317
        %v323 = vadd.f32 %v314, %v317
        %v324 = vadd.f32 %v315, %v317
        %v325 = vadd.f32 %v316, %v317
        %326 = vadd.xlane.f32.xlu0 %v318
        %v327 = vpop.xlane.xlu0 %326
        %328 = vadd.xlane.f32.xlu0 %v319
        %v329 = vpop.xlane.xlu0 %328
        %330 = vadd.xlane.f32.xlu0 %v320
        %v331 = vpop.xlane.xlu0 %330
        %332 = vadd.xlane.f32.xlu0 %v321
        %v333 = vpop.xlane.xlu0 %332
        %334 = vadd.xlane.f32.xlu0 %v322
        %v335 = vpop.xlane.xlu0 %334
        %336 = vadd.xlane.f32.xlu0 %v323
        %v337 = vpop.xlane.xlu0 %336
        %338 = vadd.xlane.f32.xlu0 %v324
        %v339 = vpop.xlane.xlu0 %338
        %340 = vadd.xlane.f32.xlu0 %v325
        %v341 = vpop.xlane.xlu0 %340
        %v342 = vrcp.pop 128.0
        %v343 = vmul.f32 128.0, %v342
        %v344 = vsub.f32 1.0, %v343
        %v345 = vmul.f32 %v342, %v344
        %v346 = vadd.f32 %v342, %v345
        %vm347 = vweird.f32 %v342
        %v348 = vsel %vm347, %v342, %v346
        %v349 = vmul.f32 %v327, %v348
        %v350 = vmul.f32 %v329, %v348
        %v351 = vmul.f32 %v331, %v348
        %v352 = vmul.f32 %v333, %v348
        %v353 = vmul.f32 %v335, %v348
        %v354 = vmul.f32 %v337, %v348
        %v355 = vmul.f32 %v339, %v348
        %v356 = vmul.f32 %v341, %v348
        %v357 = vsub.f32 %v318, %v349
        %v358 = vsub.f32 %v319, %v350
        %v359 = vsub.f32 %v320, %v351
        %v360 = vsub.f32 %v321, %v352
        %v361 = vsub.f32 %v322, %v353
        %v362 = vsub.f32 %v323, %v354
        %v363 = vsub.f32 %v324, %v355
        %v364 = vsub.f32 %v325, %v356
        %v365 = vmul.f32 %v357, %v357
        %v366 = vmul.f32 %v358, %v358
        %v367 = vmul.f32 %v359, %v359
        %v368 = vmul.f32 %v360, %v360
        %v369 = vmul.f32 %v361, %v361
        %v370 = vmul.f32 %v362, %v362
        %v371 = vmul.f32 %v363, %v363
        %v372 = vmul.f32 %v364, %v364
        %373 = vadd.xlane.f32.xlu0 %v365
        %v374 = vpop.xlane.xlu0 %373
        %375 = vadd.xlane.f32.xlu0 %v366
        %v376 = vpop.xlane.xlu0 %375
        %377 = vadd.xlane.f32.xlu0 %v367
        %v378 = vpop.xlane.xlu0 %377
        %379 = vadd.xlane.f32.xlu0 %v368
        %v380 = vpop.xlane.xlu0 %379
        %381 = vadd.xlane.f32.xlu0 %v369
        %v382 = vpop.xlane.xlu0 %381
        %383 = vadd.xlane.f32.xlu0 %v370
        %v384 = vpop.xlane.xlu0 %383
        %385 = vadd.xlane.f32.xlu0 %v371
        %v386 = vpop.xlane.xlu0 %385
        %387 = vadd.xlane.f32.xlu0 %v372
        %v388 = vpop.xlane.xlu0 %387
        %v389 = vmul.f32 %v374, %v348
        %v390 = vmul.f32 %v376, %v348
        %v391 = vmul.f32 %v378, %v348
        %v392 = vmul.f32 %v380, %v348
        %v393 = vmul.f32 %v382, %v348
        %v394 = vmul.f32 %v384, %v348
        %v395 = vmul.f32 %v386, %v348
        %v396 = vmul.f32 %v388, %v348
        %v397 = vadd.f32 %v389, 1e-12
        %v398 = vadd.f32 %v390, 1e-12
        %v399 = vadd.f32 %v391, 1e-12
        %v400 = vadd.f32 %v392, 1e-12
        %v401 = vadd.f32 %v393, 1e-12
        %v402 = vadd.f32 %v394, 1e-12
        %v403 = vadd.f32 %v395, 1e-12
        %v404 = vadd.f32 %v396, 1e-12
        %v405 = vrsqrt.pop %v397
        %v406 = vmul.f32 %v405, %v397
        %v407 = vmul.f32 %v406, %v405
        %v408 = vmul.f32 0.5, %v407
        %v409 = vsub.f32 1.5, %v408
        %v410 = vmul.f32 %v405, %v409
        %vm411 = vweird.f32 %v397
        %vm412 = vweird.f32 %v405
        %vm413 = vmor %vm411, %vm412
        %v414 = vsel %vm413, %v405, %v410
        %v415 = vrsqrt.pop %v398
        %v416 = vmul.f32 %v415, %v398
        %v417 = vmul.f32 %v416, %v415
        %v418 = vmul.f32 0.5, %v417
        %v419 = vsub.f32 1.5, %v418
        %v420 = vmul.f32 %v415, %v419
        %vm421 = vweird.f32 %v398
        %vm422 = vweird.f32 %v415
        %vm423 = vmor %vm421, %vm422
        %v424 = vsel %vm423, %v415, %v420
        %v425 = vrsqrt.pop %v399
        %v426 = vmul.f32 %v425, %v399
        %v427 = vmul.f32 %v426, %v425
        %v428 = vmul.f32 0.5, %v427
        %v429 = vsub.f32 1.5, %v428
        %v430 = vmul.f32 %v425, %v429
        %vm431 = vweird.f32 %v399
        %vm432 = vweird.f32 %v425
        %vm433 = vmor %vm431, %vm432
        %v434 = vsel %vm433, %v425, %v430
        %v435 = vrsqrt.pop %v400
        %v436 = vmul.f32 %v435, %v400
        %v437 = vmul.f32 %v436, %v435
        %v438 = vmul.f32 0.5, %v437
        %v439 = vsub.f32 1.5, %v438
        %v440 = vmul.f32 %v435, %v439
        %vm441 = vweird.f32 %v400
        %vm442 = vweird.f32 %v435
        %vm443 = vmor %vm441, %vm442
        %v444 = vsel %vm443, %v435, %v440
        %v445 = vrsqrt.pop %v401
        %v446 = vmul.f32 %v445, %v401
        %v447 = vmul.f32 %v446, %v445
        %v448 = vmul.f32 0.5, %v447
        %v449 = vsub.f32 1.5, %v448
        %v450 = vmul.f32 %v445, %v449
        %vm451 = vweird.f32 %v401
        %vm452 = vweird.f32 %v445
        %vm453 = vmor %vm451, %vm452
        %v454 = vsel %vm453, %v445, %v450
        %v455 = vrsqrt.pop %v402
        %v456 = vmul.f32 %v455, %v402
        %v457 = vmul.f32 %v456, %v455
        %v458 = vmul.f32 0.5, %v457
        %v459 = vsub.f32 1.5, %v458
        %v460 = vmul.f32 %v455, %v459
        %vm461 = vweird.f32 %v402
        %vm462 = vweird.f32 %v455
        %vm463 = vmor %vm461, %vm462
        %v464 = vsel %vm463, %v455, %v460
        %v465 = vrsqrt.pop %v403
        %v466 = vmul.f32 %v465, %v403
        %v467 = vmul.f32 %v466, %v465
        %v468 = vmul.f32 0.5, %v467
        %v469 = vsub.f32 1.5, %v468
        %v470 = vmul.f32 %v465, %v469
        %vm471 = vweird.f32 %v403
        %vm472 = vweird.f32 %v465
        %vm473 = vmor %vm471, %vm472
        %v474 = vsel %vm473, %v465, %v470
        %v475 = vrsqrt.pop %v404
        %v476 = vmul.f32 %v475, %v404
        %v477 = vmul.f32 %v476, %v475
        %v478 = vmul.f32 0.5, %v477
        %v479 = vsub.f32 1.5, %v478
        %v480 = vmul.f32 %v475, %v479
        %vm481 = vweird.f32 %v404
        %vm482 = vweird.f32 %v475
        %vm483 = vmor %vm481, %vm482
        %v484 = vsel %vm483, %v475, %v480
        %v485 = vmul.f32 %v357, %v414
        %v486 = vmul.f32 %v358, %v424
        %v487 = vmul.f32 %v359, %v434
        %v488 = vmul.f32 %v360, %v444
        %v489 = vmul.f32 %v361, %v454
        %v490 = vmul.f32 %v362, %v464
        %v491 = vmul.f32 %v363, %v474
        %v492 = vmul.f32 %v364, %v484
        %v493 = vld [vmem:[%s3] sm:$0x1]
        %v495 = vperm.slane %v493, 0
        %v497 = vmul.f32 %v485, %v495
        %v498 = vmul.f32 %v486, %v495
        %v499 = vmul.f32 %v487, %v495
        %v500 = vmul.f32 %v488, %v495
        %v501 = vmul.f32 %v489, %v495
        %v502 = vmul.f32 %v490, %v495
        %v503 = vmul.f32 %v491, %v495
        %v504 = vmul.f32 %v492, %v495
        %v505 = vld [vmem:[%s4] sm:$0x1]
        %v507 = vperm.slane %v505, 0
        %v509 = vadd.f32 %v497, %v507
        %v510 = vadd.f32 %v498, %v507
        %v511 = vadd.f32 %v499, %v507
        %v512 = vadd.f32 %v500, %v507
        %v513 = vadd.f32 %v501, %v507
        %v514 = vadd.f32 %v502, %v507
        %v515 = vadd.f32 %v503, %v507
        %v516 = vadd.f32 %v504, %v507
        %517 = vst [vmem:[%s215] sm:$0xff] %v509
        %518 = vst [vmem:[%s215 + $0x8] sm:$0xff] %v510
        %519 = vst [vmem:[%s215 + $0x10] sm:$0xff] %v511
        %520 = vst [vmem:[%s215 + $0x18] sm:$0xff] %v512
        %521 = vst [vmem:[%s215 + $0x20] sm:$0xff] %v513
        %522 = vst [vmem:[%s215 + $0x28] sm:$0xff] %v514
        %523 = vst [vmem:[%s215 + $0x30] sm:$0xff] %v515
        %524 = vst [vmem:[%s215 + $0x38] sm:$0xff] %v516
        %s525 = sand.u32 %s137, 1
        %s526 = scalar_lea.sflag [#allocation3], %s525
        %s527 = sand.u32 %s137, 1
        %s528 = smul.addr %s527, 64
        %s529 = scalar_lea.vmem [#allocation2], %s528
        // Predicated region
        $region41: #{tpu_custom_call.1} parent=39 // pred_check
          %p530 = pneg %p147
        $region42: #{tpu_custom_call.1} parent=39 // pred_check_branch
          %532 = sbr.rel (%p530) target = $region44
        $region43: #{tpu_custom_call.1} parent=39 // pred_region
          %s533 = smul.u32 8, %s19
          %535 = vsyncadd %s526, 0
          %s536 = smul.addr %s533, 8
          %s537 = scalar_lea.hbm %s5, %s536
          %s538 = sshll.u32 %s529, 4
          %s539 = int_to_ptr.vmem [resolvable:$true] %s538
          %s540 = sshll.u32 %s537, 4
          %s541 = int_to_ptr.hbm [resolvable:$true] %s540
          %546 = dma.vmem_to_hbm [thread:$0]  %s539, 1024, %s541, %s526, 128, 128, 8
        $region44: #{tpu_custom_call.1} parent=39 // pred_fallthru
          _
      $region40: #{tpu_custom_call.1} parent=5 // pred_fallthru
        _
      %p547 = scmp.le.s32.totalorder 2, %s14
      // Predicated region
      $region45: #{tpu_custom_call.1} parent=5 // pred_check
        %p548 = pneg %p547
      $region46: #{tpu_custom_call.1} parent=5 // pred_check_branch
        %550 = sbr.rel (%p548) target = $region48
      $region47: #{tpu_custom_call.1} parent=5 // pred_region
        %s551 = ssub.s32 %s14, 2
        // Predicated region
        $region49: #{tpu_custom_call.1} parent=47 // pred_check
          %p552 = pneg %p153
        $region50: #{tpu_custom_call.1} parent=47 // pred_check_branch
          %554 = sbr.rel (%p552) target = $region52
        $region51: #{tpu_custom_call.1} parent=47 // pred_region
          %s555 = sand.u32 %s138, 1
          %s556 = scalar_lea.sflag [#allocation3], %s555
          %s557 = sand.u32 %s138, 1
          %s558 = smul.addr %s557, 64
          %s559 = scalar_lea.vmem [#allocation2], %s558
          %561 = dma.done %s556, 1024
        $region52: #{tpu_custom_call.1} parent=47 // pred_fallthru
          _
      $region48: #{tpu_custom_call.1} parent=5 // pred_fallthru
        _
    $region6: #{tpu_custom_call.1} parent=1 // loop_footer
      %s18 = sadd.s32 1, %s14
    $region7: #{tpu_custom_call.1} parent=1 // loop_footer_branch
      %13 = sbr.rel target = $region3
    $region8: #{tpu_custom_call.1} parent=1 // loop_exit
      _
    %562 = vsyncpa [#allocation3], 1
    %s563 = scalar_lea.sflag [#allocation3], 1
    %564 = vsyncpa %s563, 1

</llo_original>
